<compile_context>
chip_gen: v7x
topology: tpu7x:2x2x1
jax: 0.10.0
libtpu: 0.0.40
codegen_flags: <defaults>
</compile_context>

<pallas_src>
import jax
import jax.numpy as jnp
from jax import lax
from jax.experimental import pallas as pl
from jax.experimental.pallas import tpu as pltpu


# ----------------------------- Pallas kernel ------------------------------ #
def _make_context_kernel(B, HW, Cmid, Cctx, cam):
    off = cam + 2 * Cmid  # column offset of the packed bias/scale columns

    def kernel(patches_ref, mlp_ref, w3_ref, ctxw_ref, ppack_ref, out_ref):
        # ---- carve the packed f32 parameters with static slices ---- #
        p = ppack_ref[...]
        fc1_w = p[:Cmid, 0:cam]
        red_w = p[:Cmid, cam:cam + Cmid]
        exp_w = p[:Cmid, cam + Cmid:cam + 2 * Cmid]
        fc1_b = p[:Cmid, off + 0:off + 1]
        red_b = p[:Cmid, off + 1:off + 2]
        exp_b = p[:Cmid, off + 2:off + 3]
        bias2 = p[:Cmid, off + 3:off + 4]
        ctx_b = p[:Cctx, off + 4:off + 5]

        # ---- MLP + SE excitation path, all batch rows at once ---- #
        # (fc2 is pre-folded into red_w / red_b; dropout p=0.0 is identity)
        m_t = mlp_ref[...]                                          # (cam, B)
        h1 = jnp.dot(fc1_w, m_t, preferred_element_type=jnp.float32) + fc1_b
        h1 = jnp.maximum(h1, 0.0)                                   # (Cmid, B)
        r = jnp.dot(red_w, h1, preferred_element_type=jnp.float32) + red_b
        r = jnp.maximum(r, 0.0)
        e = jnp.dot(exp_w, r, preferred_element_type=jnp.float32) + exp_b
        gate_t = jax.nn.sigmoid(e)                                  # (Cmid, B)

        # ---- 3x3 conv as ONE batched im2col matmul (BN2d scale folded) ---- #
        y = jnp.dot(w3_ref[...], patches_ref[...],
                    preferred_element_type=jnp.float32)             # (Cmid, B*HW)
        y = jnp.maximum(y + bias2, 0.0)

        # ---- SE gate per batch row (lane-tile-aligned static slices) ---- #
        parts = []
        for b in range(B):
            yb = y[:, b * HW:(b + 1) * HW] * gate_t[:, b:b + 1]
            parts.append(yb.astype(jnp.bfloat16))
        y_g = jnp.concatenate(parts, axis=1)                        # (Cmid, B*HW)

        # ---- 1x1 context projection, batched over B ---- #
        ctx = jnp.dot(ctxw_ref[...], y_g,
                      preferred_element_type=jnp.float32) + ctx_b   # (Cctx, B*HW)

        # lane-dense stores (HW is a multiple of 128)
        for b in range(B):
            out_ref[b] = ctx[:, b * HW:(b + 1) * HW]

    return kernel


# ---------------------- one-time parameter folding ------------------------ #
def fold_context_params(params, eps=1e-5):
    """Hoisted out of the per-call path: run once, reuse every forward."""
    Cmid, cam = params["fc1_w"].shape
    Cctx = params["ctx_w"].shape[0]
    Cin = params["w3"].shape[1]

    # BN1d folded into fc1 (transposed orientation: W @ m_t + b[:, None]).
    s1 = params["bn1_gamma"] / jnp.sqrt(params["bn1_var"] + eps)
    t1 = params["bn1_beta"] - params["bn1_mean"] * s1
    fc1_w = (params["fc1_w"] * s1[None, :]).astype(jnp.float32)      # (Cmid, cam)
    fc1_b = params["fc1_w"] @ t1 + params["fc1_b"]                   # (Cmid,)

    # fc2 folded into the SE reduce conv (no nonlinearity in between).
    red_w = params["red_w"][:, :, 0, 0]
    red_wf = (red_w @ params["fc2_w"]).astype(jnp.float32)           # (Cmid, Cmid)
    red_bf = red_w @ params["fc2_b"] + params["red_b"]               # (Cmid,)
    exp_w = params["exp_w"][:, :, 0, 0].astype(jnp.float32)
    exp_b = params["exp_b"]

    # 3x3 conv: (Cmid, Cin, 3, 3) -> (Cmid, 9*Cin) tap-major/channel-inner,
    # BN2d scale folded into the rows in f32 BEFORE the bf16 cast.
    s2 = params["bn2_gamma"] / jnp.sqrt(params["bn2_var"] + eps)
    w3 = jnp.transpose(params["w3"], (0, 2, 3, 1)).reshape(Cmid, 9 * Cin)
    w3 = (w3 * s2[:, None]).astype(jnp.bfloat16)
    bias2 = (params["b3"] - params["bn2_mean"]) * s2 + params["bn2_beta"]

    ctx_w = params["ctx_w"][:, :, 0, 0].astype(jnp.bfloat16)         # (Cctx, Cmid)
    ctx_b = params["ctx_b"]                                          # (Cctx,)

    # Pack every small f32 parameter into one matrix -> a single input DMA.
    R = max(Cmid, Cctx)

    def rows(m):
        return jnp.pad(m.astype(jnp.float32), ((0, R - m.shape[0]), (0, 0)))

    def col(v):
        return jnp.pad(v.astype(jnp.float32), (0, R - v.shape[0]))[:, None]

    ppack = jnp.concatenate(
        [rows(fc1_w), rows(red_wf), rows(exp_w),
         col(fc1_b), col(red_bf), col(exp_b), col(bias2), col(ctx_b)],
        axis=1)                                       # (R, cam + 2*Cmid + 5)

    return {"w3": w3, "ctx_w": ctx_w, "ppack": ppack}


# ------------------------------- forward ----------------------------------- #
@jax.jit
def context_net_forward(x_nchw, mlp_input, folded):
    B, Cin, H, W = x_nchw.shape
    cam = mlp_input.shape[-1]
    Cmid = folded["w3"].shape[0]
    Cctx = folded["ctx_w"].shape[0]
    HW = H * W

    # --- glue: im2col, (9*Cin, B*HW), tap-major / channel-inner ------------ #
    x_pad = jnp.pad(x_nchw.astype(jnp.float32),
                    ((0, 0), (0, 0), (1, 1), (1, 1)))
    taps = [x_pad[:, :, dh:dh + H, dw:dw + W]
            for dh in range(3) for dw in range(3)]                 # (B,Cin,H,W) each
    patches = jnp.stack(taps, axis=0)                              # (9,B,Cin,H,W)
    patches = patches.transpose(0, 2, 1, 3, 4)                     # (9,Cin,B,H,W)
    patches = patches.reshape(9 * Cin, B * HW).astype(jnp.bfloat16)

    # --- glue: transposed MLP input ---------------------------------------- #
    mlp_t = mlp_input.reshape(-1, cam).astype(jnp.float32).T       # (cam, B)

    kernel = _make_context_kernel(B, HW, Cmid, Cctx, cam)
    full = lambda shape: pl.BlockSpec(shape, lambda i: (0,) * len(shape))

    # Single invocation: B is folded into the N axis of the two big dots, so
    # there is nothing to gain from a grid here at these shapes.  At larger
    # B / H*W, add a leading "parallel" grid axis over batch/spatial tiles
    # (keeps weights VMEM-resident, uses both v7x TensorCores, overlaps DMA).
    out = pl.pallas_call(
        kernel,
        out_shape=jax.ShapeDtypeStruct((B, Cctx, HW), jnp.float32),
        grid=(1,),
        in_specs=[
            full(patches.shape),            # (9*Cin, B*HW)  bf16
            full(mlp_t.shape),              # (cam, B)       f32
            full(folded["w3"].shape),       # (Cmid, 9*Cin)  bf16
            full(folded["ctx_w"].shape),    # (Cctx, Cmid)   bf16
            full(folded["ppack"].shape),    # (R, cam+2*Cmid+5) f32
        ],
        out_specs=full((B, Cctx, HW)),
        compiler_params=pltpu.CompilerParams(
            dimension_semantics=("arbitrary",)),
    )(patches, mlp_t, folded["w3"], folded["ctx_w"], folded["ppack"])

    # (B, Cctx, H*W) is already NCHW ordering -- reshape only, no transpose.
    return out.reshape(B, Cctx, H, W)


# --------------------------- pure-JAX reference ---------------------------- #
def context_net_reference(x_nchw, mlp_input, p, eps=1e-5):
    cam = mlp_input.shape[-1]
    m = mlp_input.reshape(-1, cam)
    m = (m - p["bn1_mean"]) / jnp.sqrt(p["bn1_var"] + eps) * p["bn1_gamma"] + p["bn1_beta"]

    y = lax.conv_general_dilated(x_nchw, p["w3"], (1, 1), "SAME",
                                 dimension_numbers=("NCHW", "OIHW", "NCHW"))
    y = y + p["b3"][None, :, None, None]
    y = ((y - p["bn2_mean"][None, :, None, None])
         / jnp.sqrt(p["bn2_var"] + eps)[None, :, None, None]
         * p["bn2_gamma"][None, :, None, None] + p["bn2_beta"][None, :, None, None])
    y = jnp.maximum(y, 0.0)

    h = jnp.maximum(m @ p["fc1_w"].T + p["fc1_b"], 0.0)
    se = h @ p["fc2_w"].T + p["fc2_b"]
    r = jnp.maximum(se @ p["red_w"][:, :, 0, 0].T + p["red_b"], 0.0)
    e = r @ p["exp_w"][:, :, 0, 0].T + p["exp_b"]
    gate = jax.nn.sigmoid(e)

    ctx = y * gate[:, :, None, None]
    out = lax.conv_general_dilated(ctx, p["ctx_w"], (1, 1), "VALID",
                                   dimension_numbers=("NCHW", "OIHW", "NCHW"))
    return out + p["ctx_b"][None, :, None, None]


# ---------------------------------- main ----------------------------------- #
if __name__ == "__main__":
    B, Cin, H, W = 2, 4, 16, 16
    Cmid, Cctx, cam = 32, 16, 27

    key = jax.random.PRNGKey(0)
    ks = jax.random.split(key, 24)
    nrm = lambda k, shape, s=0.1: s * jax.random.normal(k, shape, jnp.float32)

    params = {
        # BatchNorm1d(cam) inference stats/affine
        "bn1_gamma": 1.0 + nrm(ks[0], (cam,)),
        "bn1_beta": nrm(ks[1], (cam,)),
        "bn1_mean": nrm(ks[2], (cam,)),
        "bn1_var": 1.0 + 0.1 * jax.random.uniform(ks[3], (cam,)),
        # reduce_conv: Conv2d(Cin, Cmid, 3, pad=1) + BN2d(Cmid)
        "w3": nrm(ks[4], (Cmid, Cin, 3, 3)),
        "b3": nrm(ks[5], (Cmid,)),
        "bn2_gamma": 1.0 + nrm(ks[6], (Cmid,)),
        "bn2_beta": nrm(ks[7], (Cmid,)),
        "bn2_mean": nrm(ks[8], (Cmid,)),
        "bn2_var": 1.0 + 0.1 * jax.random.uniform(ks[9], (Cmid,)),
        # context_mlp: Linear(cam, Cmid) -> ReLU -> Linear(Cmid, Cmid)
        "fc1_w": nrm(ks[10], (Cmid, cam)),
        "fc1_b": nrm(ks[11], (Cmid,)),
        "fc2_w": nrm(ks[12], (Cmid, Cmid)),
        "fc2_b": nrm(ks[13], (Cmid,)),
        # context_se: Conv2d(Cmid, Cmid, 1) x2
        "red_w": nrm(ks[14], (Cmid, Cmid, 1, 1)),
        "red_b": nrm(ks[15], (Cmid,)),
        "exp_w": nrm(ks[16], (Cmid, Cmid, 1, 1)),
        "exp_b": nrm(ks[17], (Cmid,)),
        # context_conv: Conv2d(Cmid, Cctx, 1)
        "ctx_w": nrm(ks[18], (Cctx, Cmid, 1, 1)),
        "ctx_b": nrm(ks[19], (Cctx,)),
    }

    x = jax.random.normal(ks[20], (B, Cin, H, W), jnp.float32)
    mlp_input = jax.random.normal(ks[21], (B, cam), jnp.float32)

    # one-time parameter folding (hoisted out of the per-call path)
    folded = jax.tree_util.tree_map(jax.block_until_ready,
                                    fold_context_params(params))

    out = context_net_forward(x, mlp_input, folded)
    out = jax.block_until_ready(out)

    ref = jax.block_until_ready(context_net_reference(x, mlp_input, params))
    assert out.shape == (B, Cctx, H, W), out.shape
    # bf16 MXU operands (f32 accumulation) -> relaxed tolerance vs. the
    # pure-f32 reference.
    max_err = float(jnp.max(jnp.abs(out - ref)))
    if max_err > 5e-2:
        raise AssertionError(f"mismatch vs reference, max_err={max_err}")

    print("KERNEL_OK")
</pallas_src>

<mosaic_0001>
module attributes {stable_mosaic.version = 11 : i64} {
  func.func @kernel(%arg0: i32, %arg1: memref<36x512xbf16, #tpu.memory_space<vmem>>, %arg2: memref<27x2xf32, #tpu.memory_space<vmem>>, %arg3: memref<32x36xbf16, #tpu.memory_space<vmem>>, %arg4: memref<16x32xbf16, #tpu.memory_space<vmem>>, %arg5: memref<32x96xf32, #tpu.memory_space<vmem>>, %arg6: memref<2x16x256xf32, #tpu.memory_space<vmem>>) attributes {dimension_semantics = [#tpu.dimension_semantics<arbitrary>], iteration_bounds = array<i64: 1>, scalar_prefetch = 0 : i64, scratch_operands = 0 : i64, tpu.core_type = #tpu.core_type<tc>, window_params = [{pipeline_mode = #tpu.pipeline_mode<synchronous>, transform_indices = @transform_0, window_bounds = array<i64: 36, 512>}, {pipeline_mode = #tpu.pipeline_mode<synchronous>, transform_indices = @transform_1, window_bounds = array<i64: 27, 2>}, {pipeline_mode = #tpu.pipeline_mode<synchronous>, transform_indices = @transform_2, window_bounds = array<i64: 32, 36>}, {pipeline_mode = #tpu.pipeline_mode<synchronous>, transform_indices = @transform_3, window_bounds = array<i64: 16, 32>}, {pipeline_mode = #tpu.pipeline_mode<synchronous>, transform_indices = @transform_4, window_bounds = array<i64: 32, 96>}, {pipeline_mode = #tpu.pipeline_mode<synchronous>, transform_indices = @transform_5, window_bounds = array<i64: 2, 16, 256>}]} {
    %c0 = arith.constant 0 : index
    %c0_0 = arith.constant 0 : index
    %0 = vector.load %arg5[%c0, %c0_0] : memref<32x96xf32, #tpu.memory_space<vmem>>, vector<32x96xf32>
    %1 = vector.extract_strided_slice %0 {offsets = [0, 0], sizes = [32, 27], strides = [1, 1]} : vector<32x96xf32> to vector<32x27xf32>
    %2 = vector.extract_strided_slice %0 {offsets = [0, 27], sizes = [32, 32], strides = [1, 1]} : vector<32x96xf32> to vector<32x32xf32>
    %3 = vector.extract_strided_slice %0 {offsets = [0, 59], sizes = [32, 32], strides = [1, 1]} : vector<32x96xf32> to vector<32x32xf32>
    %4 = vector.extract_strided_slice %0 {offsets = [0, 91], sizes = [32, 1], strides = [1, 1]} : vector<32x96xf32> to vector<32x1xf32>
    %5 = vector.extract_strided_slice %0 {offsets = [0, 92], sizes = [32, 1], strides = [1, 1]} : vector<32x96xf32> to vector<32x1xf32>
    %6 = vector.extract_strided_slice %0 {offsets = [0, 93], sizes = [32, 1], strides = [1, 1]} : vector<32x96xf32> to vector<32x1xf32>
    %7 = vector.extract_strided_slice %0 {offsets = [0, 94], sizes = [32, 1], strides = [1, 1]} : vector<32x96xf32> to vector<32x1xf32>
    %8 = vector.extract_strided_slice %0 {offsets = [0, 95], sizes = [16, 1], strides = [1, 1]} : vector<32x96xf32> to vector<16x1xf32>
    %c0_1 = arith.constant 0 : index
    %c0_2 = arith.constant 0 : index
    %9 = vector.load %arg2[%c0_1, %c0_2] : memref<27x2xf32, #tpu.memory_space<vmem>>, vector<27x2xf32>
    %cst = arith.constant dense<0.000000e+00> : vector<32x2xf32>
    %10 = tpu.matmul %1, %9, %cst {dimension_numbers = #tpu.dot_dimension_numbers<[1], [0], [0], [1], [0, 0, 1, 1], [], []>} : vector<32x27xf32>, vector<27x2xf32>, vector<32x2xf32> -> vector<32x2xf32>
    %11 = vector.broadcast %4 : vector<32x1xf32> to vector<32x2xf32>
    %12 = arith.addf %10, %11 : vector<32x2xf32>
    %cst_3 = arith.constant 0.000000e+00 : f32
    %13 = vector.broadcast %cst_3 : f32 to vector<32x2xf32>
    %14 = arith.maximumf %12, %13 : vector<32x2xf32>
    %cst_4 = arith.constant dense<0.000000e+00> : vector<32x2xf32>
    %15 = tpu.matmul %2, %14, %cst_4 {dimension_numbers = #tpu.dot_dimension_numbers<[1], [0], [0], [1], [0, 0, 1, 1], [], []>} : vector<32x32xf32>, vector<32x2xf32>, vector<32x2xf32> -> vector<32x2xf32>
    %16 = vector.broadcast %5 : vector<32x1xf32> to vector<32x2xf32>
    %17 = arith.addf %15, %16 : vector<32x2xf32>
    %cst_5 = arith.constant 0.000000e+00 : f32
    %18 = vector.broadcast %cst_5 : f32 to vector<32x2xf32>
    %19 = arith.maximumf %17, %18 : vector<32x2xf32>
    %cst_6 = arith.constant dense<0.000000e+00> : vector<32x2xf32>
    %20 = tpu.matmul %3, %19, %cst_6 {dimension_numbers = #tpu.dot_dimension_numbers<[1], [0], [0], [1], [0, 0, 1, 1], [], []>} : vector<32x32xf32>, vector<32x2xf32>, vector<32x2xf32> -> vector<32x2xf32>
    %21 = vector.broadcast %6 : vector<32x1xf32> to vector<32x2xf32>
    %22 = arith.addf %20, %21 : vector<32x2xf32>
    %23 = arith.negf %22 : vector<32x2xf32>
    %24 = math.exp %23 : vector<32x2xf32>
    %cst_7 = arith.constant 1.000000e+00 : f32
    %25 = vector.broadcast %cst_7 : f32 to vector<32x2xf32>
    %26 = arith.addf %25, %24 : vector<32x2xf32>
    %27 = arith.divf %25, %26 : vector<32x2xf32>
    %c0_8 = arith.constant 0 : index
    %c0_9 = arith.constant 0 : index
    %28 = vector.load %arg3[%c0_8, %c0_9] : memref<32x36xbf16, #tpu.memory_space<vmem>>, vector<32x36xbf16>
    %c0_10 = arith.constant 0 : index
    %c0_11 = arith.constant 0 : index
    %29 = vector.load %arg1[%c0_10, %c0_11] : memref<36x512xbf16, #tpu.memory_space<vmem>>, vector<36x512xbf16>
    %cst_12 = arith.constant dense<0.000000e+00> : vector<32x512xf32>
    %30 = tpu.matmul %28, %29, %cst_12 {dimension_numbers = #tpu.dot_dimension_numbers<[1], [0], [0], [1], [0, 0, 1, 1], [], []>} : vector<32x36xbf16>, vector<36x512xbf16>, vector<32x512xf32> -> vector<32x512xf32>
    %31 = vector.broadcast %7 : vector<32x1xf32> to vector<32x512xf32>
    %32 = arith.addf %30, %31 : vector<32x512xf32>
    %cst_13 = arith.constant 0.000000e+00 : f32
    %33 = vector.broadcast %cst_13 : f32 to vector<32x512xf32>
    %34 = arith.maximumf %32, %33 : vector<32x512xf32>
    %35 = vector.extract_strided_slice %34 {offsets = [0, 0], sizes = [32, 256], strides = [1, 1]} : vector<32x512xf32> to vector<32x256xf32>
    %36 = vector.extract_strided_slice %27 {offsets = [0, 0], sizes = [32, 1], strides = [1, 1]} : vector<32x2xf32> to vector<32x1xf32>
    %37 = vector.broadcast %36 : vector<32x1xf32> to vector<32x256xf32>
    %38 = arith.mulf %35, %37 : vector<32x256xf32>
    %39 = arith.truncf %38 : vector<32x256xf32> to vector<32x256xbf16>
    %40 = vector.extract_strided_slice %34 {offsets = [0, 256], sizes = [32, 256], strides = [1, 1]} : vector<32x512xf32> to vector<32x256xf32>
    %41 = vector.extract_strided_slice %27 {offsets = [0, 1], sizes = [32, 1], strides = [1, 1]} : vector<32x2xf32> to vector<32x1xf32>
    %42 = vector.broadcast %41 : vector<32x1xf32> to vector<32x256xf32>
    %43 = arith.mulf %40, %42 : vector<32x256xf32>
    %44 = arith.truncf %43 : vector<32x256xf32> to vector<32x256xbf16>
    %45 = tpu.concatenate %39, %44 in 1 : vector<32x256xbf16>, vector<32x256xbf16> -> vector<32x512xbf16>
    %c0_14 = arith.constant 0 : index
    %c0_15 = arith.constant 0 : index
    %46 = vector.load %arg4[%c0_14, %c0_15] : memref<16x32xbf16, #tpu.memory_space<vmem>>, vector<16x32xbf16>
    %cst_16 = arith.constant dense<0.000000e+00> : vector<16x512xf32>
    %47 = tpu.matmul %46, %45, %cst_16 {dimension_numbers = #tpu.dot_dimension_numbers<[1], [0], [0], [1], [0, 0, 1, 1], [], []>} : vector<16x32xbf16>, vector<32x512xbf16>, vector<16x512xf32> -> vector<16x512xf32>
    %48 = vector.broadcast %8 : vector<16x1xf32> to vector<16x512xf32>
    %49 = arith.addf %47, %48 : vector<16x512xf32>
    %50 = vector.extract_strided_slice %49 {offsets = [0, 0], sizes = [16, 256], strides = [1, 1]} : vector<16x512xf32> to vector<16x256xf32>
    %c0_17 = arith.constant 0 : index
    %c0_18 = arith.constant 0 : index
    %c0_19 = arith.constant 0 : index
    %51 = vector.load %arg6[%c0_17, %c0_18, %c0_19] : memref<2x16x256xf32, #tpu.memory_space<vmem>>, vector<1x16x256xf32>
    %52 = vector.shape_cast %51 : vector<1x16x256xf32> to vector<16x256xf32>
    %53 = vector.shape_cast %50 : vector<16x256xf32> to vector<1x16x256xf32>
    tpu.vector_store %arg6[%c0_17, %c0_18, %c0_19], %53 {strides = array<i32>} : memref<2x16x256xf32, #tpu.memory_space<vmem>>, vector<1x16x256xf32>,
    %54 = vector.extract_strided_slice %49 {offsets = [0, 256], sizes = [16, 256], strides = [1, 1]} : vector<16x512xf32> to vector<16x256xf32>
    %c1 = arith.constant 1 : index
    %c0_20 = arith.constant 0 : index
    %c0_21 = arith.constant 0 : index
    %55 = vector.load %arg6[%c1, %c0_20, %c0_21] : memref<2x16x256xf32, #tpu.memory_space<vmem>>, vector<1x16x256xf32>
    %56 = vector.shape_cast %55 : vector<1x16x256xf32> to vector<16x256xf32>
    %57 = vector.shape_cast %54 : vector<16x256xf32> to vector<1x16x256xf32>
    tpu.vector_store %arg6[%c1, %c0_20, %c0_21], %57 {strides = array<i32>} : memref<2x16x256xf32, #tpu.memory_space<vmem>>, vector<1x16x256xf32>,
    return
  }
  func.func @transform_0(%arg0: i32) -> (i32, i32) {
    %c0_i32 = arith.constant 0 : i32
    %c0_i32_0 = arith.constant 0 : i32
    %c0_i32_1 = arith.constant 0 : i32
    return %c0_i32, %c0_i32_0 : i32, i32
  }
  func.func @transform_1(%arg0: i32) -> (i32, i32) {
    %c0_i32 = arith.constant 0 : i32
    %c0_i32_0 = arith.constant 0 : i32
    %c0_i32_1 = arith.constant 0 : i32
    return %c0_i32, %c0_i32_0 : i32, i32
  }
  func.func @transform_2(%arg0: i32) -> (i32, i32) {
    %c0_i32 = arith.constant 0 : i32
    %c0_i32_0 = arith.constant 0 : i32
    %c0_i32_1 = arith.constant 0 : i32
    return %c0_i32, %c0_i32_0 : i32, i32
  }
  func.func @transform_3(%arg0: i32) -> (i32, i32) {
    %c0_i32 = arith.constant 0 : i32
    %c0_i32_0 = arith.constant 0 : i32
    %c0_i32_1 = arith.constant 0 : i32
    return %c0_i32, %c0_i32_0 : i32, i32
  }
  func.func @transform_4(%arg0: i32) -> (i32, i32) {
    %c0_i32 = arith.constant 0 : i32
    %c0_i32_0 = arith.constant 0 : i32
    %c0_i32_1 = arith.constant 0 : i32
    return %c0_i32, %c0_i32_0 : i32, i32
  }
  func.func @transform_5(%arg0: i32) -> (i32, i32, i32) {
    %c0_i32 = arith.constant 0 : i32
    %c0_i32_0 = arith.constant 0 : i32
    %c0_i32_1 = arith.constant 0 : i32
    %c0_i32_2 = arith.constant 0 : i32
    return %c0_i32, %c0_i32_0, %c0_i32_1 : i32, i32, i32
  }
}

</mosaic_0001>

<llo_original>
// kernel: context_net_forward.1
$region0: #{context_net_forward.1}
  #allocation0 [shape = 'u32[]', space=smem, size = 0x4, offset = 0x4, fixed_abs, tag = 'smem constant byte address 0x4 - core index']
  #allocation1 [shape = 'u32[144,128]{1,0:T(1,128)}', space=vmem, size = 0x12000, scoped, tag = 'internal scratch']
  %s0 = inlined_call_operand.vmem [shape: bf16[36,512], index: 0, kind: input, shape index: {}]
  %s1 = inlined_call_operand.vmem [shape: f32[27,2], index: 1, kind: input, shape index: {}]
  %s2 = inlined_call_operand.vmem [shape: bf16[32,36], index: 2, kind: input, shape index: {}]
  %s3 = inlined_call_operand.vmem [shape: bf16[16,32], index: 3, kind: input, shape index: {}]
  %s4 = inlined_call_operand.vmem [shape: f32[32,96], index: 4, kind: input, shape index: {}]
  %s5 = inlined_call_operand.vmem [shape: f32[2,16,256], index: 5, kind: output, shape index: {}]
  %s6 = sld [smem:[#allocation0]]
  $region30: #{context_net_forward.1} parent=0
    _
  %s8 = ssub.s32 1, %s6
  %s9 = scalar_select 0, %s8, %s6
  // Predicated region
  $region2: #{context_net_forward.1} parent=0 // pred_check
    _
  $region3: #{context_net_forward.1} parent=0 // pred_check_branch
    %11 = sbr.rel (0) target = $region5
  $region4: #{context_net_forward.1} parent=0 // pred_region
    _
  $region5: #{context_net_forward.1} parent=0 // pred_fallthru
    _
  // Predicated region
  $region6: #{context_net_forward.1} parent=0 // pred_check
    _
  $region7: #{context_net_forward.1} parent=0 // pred_check_branch
    %13 = sbr.rel (0) target = $region9
  $region8: #{context_net_forward.1} parent=0 // pred_region
    _
  $region9: #{context_net_forward.1} parent=0 // pred_fallthru
    _
  // Predicated region
  $region10: #{context_net_forward.1} parent=0 // pred_check
    _
  $region11: #{context_net_forward.1} parent=0 // pred_check_branch
    %15 = sbr.rel (0) target = $region13
  $region12: #{context_net_forward.1} parent=0 // pred_region
    _
  $region13: #{context_net_forward.1} parent=0 // pred_fallthru
    _
  // Predicated region
  $region14: #{context_net_forward.1} parent=0 // pred_check
    _
  $region15: #{context_net_forward.1} parent=0 // pred_check_branch
    %17 = sbr.rel (0) target = $region17
  $region16: #{context_net_forward.1} parent=0 // pred_region
    _
  $region17: #{context_net_forward.1} parent=0 // pred_fallthru
    _
  // Predicated region
  $region18: #{context_net_forward.1} parent=0 // pred_check
    _
  $region19: #{context_net_forward.1} parent=0 // pred_check_branch
    %19 = sbr.rel (0) target = $region21
  $region20: #{context_net_forward.1} parent=0 // pred_region
    _
  $region21: #{context_net_forward.1} parent=0 // pred_fallthru
    _
  %v21 = vld [vmem:[%s4] sm:$0xff]
  %v22 = vld [vmem:[%s4 + $0x8] sm:$0xff]
  %v23 = vld [vmem:[%s4 + $0x10] sm:$0xff]
  %v24 = vld [vmem:[%s4 + $0x18] sm:$0xff]
  %v25 = vld [vmem:[%s1] sm:$0xff]
  %v26 = vld [vmem:[%s1 + $0x8] sm:$0xff]
  %v27 = vld [vmem:[%s1 + $0x10] sm:$0xff]
  %v28 = vld [vmem:[%s1 + $0x18] sm:$0x7]
  %30 = vset.pattern.permute.xlu0 91
  %31 = vperm.xlu0 %30, %v21
  %v32 = vpop.permute.xlu0 %31
  %35 = vset.pattern.permute.xlu0 91
  %36 = vperm.xlu0 %35, %v22
  %v37 = vpop.permute.xlu0 %36
  %40 = vset.pattern.permute.xlu0 91
  %41 = vperm.xlu0 %40, %v23
  %v42 = vpop.permute.xlu0 %41
  %45 = vset.pattern.permute.xlu0 91
  %46 = vperm.xlu0 %45, %v24
  %v47 = vpop.permute.xlu0 %46
  %vm49 = vcmask 220160
  %v50 = vsel %vm49, %v21, 0
  %v52 = vsel %vm49, %v22, 0
  %v54 = vsel %vm49, %v23, 0
  %v56 = vsel %vm49, %v24, 0
  %vm58 = vcmask 1042432
  %v60 = vsel %vm58, %v28, 0
  %62 = vmatprep.subr.mxu0 0.0
  %63 = vmatpush1.msra.mxu0 %v25
  %64 = vmatprep.subr.mxu0 0.0
  %65 = vmatpush1.msra.mxu0 %v26
  %66 = vmatprep.subr.mxu0 0.0
  %67 = vmatpush1.msra.mxu0 %v27
  %68 = vmatprep.subr.mxu0 0.0
  %69 = vmatpush1.msra.mxu0 %v60
  %70 = vmatprep.subr.mxu0 0.0
  %71 = vmatpush1.msra.mxu0 0.0
  %72 = vmatprep.subr.mxu0 0.0
  %73 = vmatpush1.msra.mxu0 0.0
  %74 = vmatprep.subr.mxu0 0.0
  %75 = vmatpush1.msra.mxu0 0.0
  %76 = vmatprep.subr.mxu0 0.0
  %77 = vmatpush1.msra.mxu0 0.0
  %78 = vmatprep.subr.mxu0 0.0
  %79 = vmatpush1.msra.mxu0 0.0
  %80 = vmatprep.subr.mxu0 0.0
  %81 = vmatpush1.msra.mxu0 0.0
  %82 = vmatprep.subr.mxu0 0.0
  %83 = vmatpush1.msra.mxu0 0.0
  %84 = vmatprep.subr.mxu0 0.0
  %85 = vmatpush1.msra.mxu0 0.0
  %86 = vmatprep.subr.mxu0 0.0
  %87 = vmatpush1.msra.mxu0 0.0
  %88 = vmatprep.subr.mxu0 0.0
  %89 = vmatpush1.msra.mxu0 0.0
  %90 = vmatprep.subr.mxu0 0.0
  %91 = vmatpush1.msra.mxu0 0.0
  %92 = vmatprep.subr.mxu0 0.0
  %93 = vmatpush1.msra.mxu0 0.0
  %94 = vmatprep.subr.mxu0 0.0
  %95 = vmatpush1.msra.mxu0 0.0
  %96 = vmatprep.subr.mxu0 0.0
  %97 = vmatpush1.msra.mxu0 0.0
  %98 = vmatprep.subr.mxu0 0.0
  %99 = vmatpush1.msra.mxu0 0.0
  %100 = vmatprep.subr.mxu0 0.0
  %101 = vmatpush1.msra.mxu0 0.0
  %102 = vmatprep.subr.mxu0 0.0
  %103 = vmatpush1.msra.mxu0 0.0
  %104 = vmatprep.subr.mxu0 0.0
  %105 = vmatpush1.msra.mxu0 0.0
  %106 = vmatprep.subr.mxu0 0.0
  %107 = vmatpush1.msra.mxu0 0.0
  %108 = vmatprep.subr.mxu0 0.0
  %109 = vmatpush1.msra.mxu0 0.0
  %110 = vmatprep.subr.mxu0 0.0
  %111 = vmatpush1.msra.mxu0 0.0
  %112 = vmatprep.subr.mxu0 0.0
  %113 = vmatpush1.msra.mxu0 0.0
  %114 = vmatprep.subr.mxu0 0.0
  %115 = vmatpush1.msra.mxu0 0.0
  %116 = vmatprep.subr.mxu0 0.0
  %117 = vmatpush1.msra.mxu0 0.0
  %118 = vmatprep.subr.mxu0 0.0
  %119 = vmatpush1.msra.mxu0 0.0
  %120 = vmatprep.subr.mxu0 0.0
  %121 = vmatpush1.msra.mxu0 0.0
  %122 = vmatprep.subr.mxu0 0.0
  %123 = vmatpush1.msra.mxu0 0.0
  %124 = vmatprep.subr.mxu0 0.0
  %125 = vmatpush1.msra.mxu0 0.0
  %126 = vmatprep.mubr.f32.mxu0 0.0
  %127 = vmatmul.mubr.f32.gmra.mrb[0].mxu0 %v50
  %v128 = vpop.f32.mrb[0].mxu0
  %v129 = vadd.f32 %v32, %v128
  %v130 = vpop.f32.mrb[0].mxu0
  %131 = vmatprep.mubr.f32.mxu0 0.0
  %132 = vmatmul.mubr.f32.gmra.mrb[0].mxu0 %v52
  %v133 = vpop.f32.mrb[0].mxu0
  %v134 = vadd.f32 %v37, %v133
  %v135 = vpop.f32.mrb[0].mxu0
  %136 = vmatprep.mubr.f32.mxu0 0.0
  %137 = vmatmul.mubr.f32.gmra.mrb[0].mxu0 %v54
  %v138 = vpop.f32.mrb[0].mxu0
  %v139 = vadd.f32 %v42, %v138
  %v140 = vpop.f32.mrb[0].mxu0
  %141 = vmatprep.mubr.f32.mxu0 0.0
  %142 = vmatmul.mubr.f32.gmra.mrb[0].mxu0 %v56
  %v143 = vpop.f32.mrb[0].mxu0
  %v144 = vadd.f32 %v47, %v143
  %v145 = vpop.f32.mrb[0].mxu0
  %146 = vdwg.mxu0
  %v147 = vmax.f32 %v129, 0.0
  %v148 = vmax.f32 %v134, 0.0
  %v149 = vmax.f32 %v139, 0.0
  %v150 = vmax.f32 %v144, 0.0
  %151 = vset.pattern.permute.xlu0 92
  %152 = vperm.xlu0 %151, %v21
  %v153 = vpop.permute.xlu0 %152
  %155 = vset.pattern.permute.xlu0 92
  %156 = vperm.xlu0 %155, %v22
  %v157 = vpop.permute.xlu0 %156
  %159 = vset.pattern.permute.xlu0 92
  %160 = vperm.xlu0 %159, %v23
  %v161 = vpop.permute.xlu0 %160
  %163 = vset.pattern.permute.xlu0 92
  %164 = vperm.xlu0 %163, %v24
  %v165 = vpop.permute.xlu0 %164
  %167 = vrot.lane.b32.xlu0 %v21, 101
  %v168 = vpop.permute.xlu0 %167
  %169 = vrot.lane.b32.xlu0 %v22, 101
  %v170 = vpop.permute.xlu0 %169
  %171 = vrot.lane.b32.xlu0 %v23, 101
  %v172 = vpop.permute.xlu0 %171
  %173 = vrot.lane.b32.xlu0 %v24, 101
  %v174 = vpop.permute.xlu0 %173
  %vm175 = vcmask 261120
  %v176 = vsel %vm175, %v168, 0
  %v178 = vsel %vm175, %v170, 0
  %v180 = vsel %vm175, %v172, 0
  %v182 = vsel %vm175, %v174, 0
  %184 = vmatprep.subr.mxu0 0.0
  %185 = vmatpush1.msra.mxu0 %v147
  %186 = vmatprep.subr.mxu0 0.0
  %187 = vmatpush1.msra.mxu0 %v148
  %188 = vmatprep.subr.mxu0 0.0
  %189 = vmatpush1.msra.mxu0 %v149
  %190 = vmatprep.subr.mxu0 0.0
  %191 = vmatpush1.msra.mxu0 %v150
  %192 = vmatprep.subr.mxu0 0.0
  %193 = vmatpush1.msra.mxu0 0.0
  %194 = vmatprep.subr.mxu0 0.0
  %195 = vmatpush1.msra.mxu0 0.0
  %196 = vmatprep.subr.mxu0 0.0
  %197 = vmatpush1.msra.mxu0 0.0
  %198 = vmatprep.subr.mxu0 0.0
  %199 = vmatpush1.msra.mxu0 0.0
  %200 = vmatprep.subr.mxu0 0.0
  %201 = vmatpush1.msra.mxu0 0.0
  %202 = vmatprep.subr.mxu0 0.0
  %203 = vmatpush1.msra.mxu0 0.0
  %204 = vmatprep.subr.mxu0 0.0
  %205 = vmatpush1.msra.mxu0 0.0
  %206 = vmatprep.subr.mxu0 0.0
  %207 = vmatpush1.msra.mxu0 0.0
  %208 = vmatprep.subr.mxu0 0.0
  %209 = vmatpush1.msra.mxu0 0.0
  %210 = vmatprep.subr.mxu0 0.0
  %211 = vmatpush1.msra.mxu0 0.0
  %212 = vmatprep.subr.mxu0 0.0
  %213 = vmatpush1.msra.mxu0 0.0
  %214 = vmatprep.subr.mxu0 0.0
  %215 = vmatpush1.msra.mxu0 0.0
  %216 = vmatprep.subr.mxu0 0.0
  %217 = vmatpush1.msra.mxu0 0.0
  %218 = vmatprep.subr.mxu0 0.0
  %219 = vmatpush1.msra.mxu0 0.0
  %220 = vmatprep.subr.mxu0 0.0
  %221 = vmatpush1.msra.mxu0 0.0
  %222 = vmatprep.subr.mxu0 0.0
  %223 = vmatpush1.msra.mxu0 0.0
  %224 = vmatprep.subr.mxu0 0.0
  %225 = vmatpush1.msra.mxu0 0.0
  %226 = vmatprep.subr.mxu0 0.0
  %227 = vmatpush1.msra.mxu0 0.0
  %228 = vmatprep.subr.mxu0 0.0
  %229 = vmatpush1.msra.mxu0 0.0
  %230 = vmatprep.subr.mxu0 0.0
  %231 = vmatpush1.msra.mxu0 0.0
  %232 = vmatprep.subr.mxu0 0.0
  %233 = vmatpush1.msra.mxu0 0.0
  %234 = vmatprep.subr.mxu0 0.0
  %235 = vmatpush1.msra.mxu0 0.0
  %236 = vmatprep.subr.mxu0 0.0
  %237 = vmatpush1.msra.mxu0 0.0
  %238 = vmatprep.subr.mxu0 0.0
  %239 = vmatpush1.msra.mxu0 0.0
  %240 = vmatprep.subr.mxu0 0.0
  %241 = vmatpush1.msra.mxu0 0.0
  %242 = vmatprep.subr.mxu0 0.0
  %243 = vmatpush1.msra.mxu0 0.0
  %244 = vmatprep.subr.mxu0 0.0
  %245 = vmatpush1.msra.mxu0 0.0
  %246 = vmatprep.subr.mxu0 0.0
  %247 = vmatpush1.msra.mxu0 0.0
  %248 = vmatprep.mubr.f32.mxu0 0.0
  %249 = vmatmul.mubr.f32.gmra.mrb[0].mxu0 %v176
  %v250 = vpop.f32.mrb[0].mxu0
  %v251 = vadd.f32 %v153, %v250
  %v252 = vpop.f32.mrb[0].mxu0
  %253 = vmatprep.mubr.f32.mxu0 0.0
  %254 = vmatmul.mubr.f32.gmra.mrb[0].mxu0 %v178
  %v255 = vpop.f32.mrb[0].mxu0
  %v256 = vadd.f32 %v157, %v255
  %v257 = vpop.f32.mrb[0].mxu0
  %258 = vmatprep.mubr.f32.mxu0 0.0
  %259 = vmatmul.mubr.f32.gmra.mrb[0].mxu0 %v180
  %v260 = vpop.f32.mrb[0].mxu0
  %v261 = vadd.f32 %v161, %v260
  %v262 = vpop.f32.mrb[0].mxu0
  %263 = vmatprep.mubr.f32.mxu0 0.0
  %264 = vmatmul.mubr.f32.gmra.mrb[0].mxu0 %v182
  %v265 = vpop.f32.mrb[0].mxu0
  %v266 = vadd.f32 %v165, %v265
  %v267 = vpop.f32.mrb[0].mxu0
  %268 = vdwg.mxu0
  %v269 = vmax.f32 %v251, 0.0
  %v270 = vmax.f32 %v256, 0.0
  %v271 = vmax.f32 %v261, 0.0
  %v272 = vmax.f32 %v266, 0.0
  %273 = vset.pattern.permute.xlu0 93
  %274 = vperm.xlu0 %273, %v21
  %v275 = vpop.permute.xlu0 %274
  %277 = vset.pattern.permute.xlu0 93
  %278 = vperm.xlu0 %277, %v22
  %v279 = vpop.permute.xlu0 %278
  %281 = vset.pattern.permute.xlu0 93
  %282 = vperm.xlu0 %281, %v23
  %v283 = vpop.permute.xlu0 %282
  %285 = vset.pattern.permute.xlu0 93
  %286 = vperm.xlu0 %285, %v24
  %v287 = vpop.permute.xlu0 %286
  %289 = vrot.lane.b32.xlu0 %v21, 69
  %v290 = vpop.permute.xlu0 %289
  %291 = vrot.lane.b32.xlu0 %v22, 69
  %v292 = vpop.permute.xlu0 %291
  %293 = vrot.lane.b32.xlu0 %v23, 69
  %v294 = vpop.permute.xlu0 %293
  %295 = vrot.lane.b32.xlu0 %v24, 69
  %v296 = vpop.permute.xlu0 %295
  %v297 = vsel %vm175, %v290, 0
  %v299 = vsel %vm175, %v292, 0
  %v301 = vsel %vm175, %v294, 0
  %v303 = vsel %vm175, %v296, 0
  %305 = vmatprep.subr.mxu0 0.0
  %306 = vmatpush1.msra.mxu0 %v269
  %307 = vmatprep.subr.mxu0 0.0
  %308 = vmatpush1.msra.mxu0 %v270
  %309 = vmatprep.subr.mxu0 0.0
  %310 = vmatpush1.msra.mxu0 %v271
  %311 = vmatprep.subr.mxu0 0.0
  %312 = vmatpush1.msra.mxu0 %v272
  %313 = vmatprep.subr.mxu0 0.0
  %314 = vmatpush1.msra.mxu0 0.0
  %315 = vmatprep.subr.mxu0 0.0
  %316 = vmatpush1.msra.mxu0 0.0
  %317 = vmatprep.subr.mxu0 0.0
  %318 = vmatpush1.msra.mxu0 0.0
  %319 = vmatprep.subr.mxu0 0.0
  %320 = vmatpush1.msra.mxu0 0.0
  %321 = vmatprep.subr.mxu0 0.0
  %322 = vmatpush1.msra.mxu0 0.0
  %323 = vmatprep.subr.mxu0 0.0
  %324 = vmatpush1.msra.mxu0 0.0
  %325 = vmatprep.subr.mxu0 0.0
  %326 = vmatpush1.msra.mxu0 0.0
  %327 = vmatprep.subr.mxu0 0.0
  %328 = vmatpush1.msra.mxu0 0.0
  %329 = vmatprep.subr.mxu0 0.0
  %330 = vmatpush1.msra.mxu0 0.0
  %331 = vmatprep.subr.mxu0 0.0
  %332 = vmatpush1.msra.mxu0 0.0
  %333 = vmatprep.subr.mxu0 0.0
  %334 = vmatpush1.msra.mxu0 0.0
  %335 = vmatprep.subr.mxu0 0.0
  %336 = vmatpush1.msra.mxu0 0.0
  %337 = vmatprep.subr.mxu0 0.0
  %338 = vmatpush1.msra.mxu0 0.0
  %339 = vmatprep.subr.mxu0 0.0
  %340 = vmatpush1.msra.mxu0 0.0
  %341 = vmatprep.subr.mxu0 0.0
  %342 = vmatpush1.msra.mxu0 0.0
  %343 = vmatprep.subr.mxu0 0.0
  %344 = vmatpush1.msra.mxu0 0.0
  %345 = vmatprep.subr.mxu0 0.0
  %346 = vmatpush1.msra.mxu0 0.0
  %347 = vmatprep.subr.mxu0 0.0
  %348 = vmatpush1.msra.mxu0 0.0
  %349 = vmatprep.subr.mxu0 0.0
  %350 = vmatpush1.msra.mxu0 0.0
  %351 = vmatprep.subr.mxu0 0.0
  %352 = vmatpush1.msra.mxu0 0.0
  %353 = vmatprep.subr.mxu0 0.0
  %354 = vmatpush1.msra.mxu0 0.0
  %355 = vmatprep.subr.mxu0 0.0
  %356 = vmatpush1.msra.mxu0 0.0
  %357 = vmatprep.subr.mxu0 0.0
  %358 = vmatpush1.msra.mxu0 0.0
  %359 = vmatprep.subr.mxu0 0.0
  %360 = vmatpush1.msra.mxu0 0.0
  %361 = vmatprep.subr.mxu0 0.0
  %362 = vmatpush1.msra.mxu0 0.0
  %363 = vmatprep.subr.mxu0 0.0
  %364 = vmatpush1.msra.mxu0 0.0
  %365 = vmatprep.subr.mxu0 0.0
  %366 = vmatpush1.msra.mxu0 0.0
  %367 = vmatprep.subr.mxu0 0.0
  %368 = vmatpush1.msra.mxu0 0.0
  %369 = vmatprep.mubr.f32.mxu0 0.0
  %370 = vmatmul.mubr.f32.gmra.mrb[0].mxu0 %v297
  %v371 = vpop.f32.mrb[0].mxu0
  %v372 = vadd.f32 %v275, %v371
  %v373 = vpop.f32.mrb[0].mxu0
  %374 = vmatprep.mubr.f32.mxu0 0.0
  %375 = vmatmul.mubr.f32.gmra.mrb[0].mxu0 %v299
  %v376 = vpop.f32.mrb[0].mxu0
  %v377 = vadd.f32 %v279, %v376
  %v378 = vpop.f32.mrb[0].mxu0
  %379 = vmatprep.mubr.f32.mxu0 0.0
  %380 = vmatmul.mubr.f32.gmra.mrb[0].mxu0 %v301
  %v381 = vpop.f32.mrb[0].mxu0
  %v382 = vadd.f32 %v283, %v381
  %v383 = vpop.f32.mrb[0].mxu0
  %384 = vmatprep.mubr.f32.mxu0 0.0
  %385 = vmatmul.mubr.f32.gmra.mrb[0].mxu0 %v303
  %v386 = vpop.f32.mrb[0].mxu0
  %v387 = vadd.f32 %v287, %v386
  %v388 = vpop.f32.mrb[0].mxu0
  %389 = vdwg.mxu0
  %v390 = vxor.u32 %v372, 2147483648
  %v391 = vxor.u32 %v377, 2147483648
  %v392 = vxor.u32 %v382, 2147483648
  %v393 = vxor.u32 %v387, 2147483648
  %v394 = vmul.f32 %v390, 1.442695
  %v395 = vpow.pop %v394
  %v396 = vmul.f32 %v391, 1.442695
  %v397 = vpow.pop %v396
  %v398 = vmul.f32 %v392, 1.442695
  %v399 = vpow.pop %v398
  %v400 = vmul.f32 %v393, 1.442695
  %v401 = vpow.pop %v400
  %v402 = vadd.f32 %v395, 1.0
  %v403 = vadd.f32 %v397, 1.0
  %v404 = vadd.f32 %v399, 1.0
  %v405 = vadd.f32 %v401, 1.0
  %v406 = vrcp.pop %v402
  %v407 = vmul.f32 1.0, %v406
  %v408 = vrcp.pop %v403
  %v409 = vmul.f32 1.0, %v408
  %v410 = vrcp.pop %v404
  %v411 = vmul.f32 1.0, %v410
  %v412 = vrcp.pop %v405
  %v413 = vmul.f32 1.0, %v412
  %v414 = vld [vmem:[%s2] sm:$0xf]
  %v415 = vld [vmem:[%s2 + $0x4] sm:$0xf]
  %v416 = vld [vmem:[%s2 + $0x8] sm:$0xf]
  %v417 = vld [vmem:[%s2 + $0xc] sm:$0xf]
  %v418 = vld [vmem:[%s0] sm:$0xff]
  %v419 = vld [vmem:[%s0 + $0x8] sm:$0xff]
  %v420 = vld [vmem:[%s0 + $0x10] sm:$0xff]
  %v421 = vld [vmem:[%s0 + $0x18] sm:$0xff]
  %v422 = vld [vmem:[%s0 + $0x20] sm:$0xff]
  %v423 = vld [vmem:[%s0 + $0x28] sm:$0xff]
  %v424 = vld [vmem:[%s0 + $0x30] sm:$0xff]
  %v425 = vld [vmem:[%s0 + $0x38] sm:$0xff]
  %v426 = vld [vmem:[%s0 + $0x40] sm:$0x33]
  %v427 = vld [vmem:[%s0 + $0x48] sm:$0x33]
  %428 = vset.pattern.permute.xlu0 94
  %429 = vperm.xlu0 %428, %v21
  %v430 = vpop.permute.xlu0 %429
  %432 = vset.pattern.permute.xlu0 94
  %433 = vperm.xlu0 %432, %v22
  %v434 = vpop.permute.xlu0 %433
  %436 = vset.pattern.permute.xlu0 94
  %437 = vperm.xlu0 %436, %v23
  %v438 = vpop.permute.xlu0 %437
  %440 = vset.pattern.permute.xlu0 94
  %441 = vperm.xlu0 %440, %v24
  %v442 = vpop.permute.xlu0 %441
  %v448 = vunpack.c.l.b16 %v414
  %v449 = vunpack.c.l.b16 %v415
  %v450 = vunpack.c.l.b16 %v416
  %v451 = vunpack.c.l.b16 %v417
  %v452 = vpack.c.b16 %v449, %v448
  %v453 = vpack.c.b16 %v451, %v450
  %v464 = vunpack.c.l.b16 %v418
  %v465 = vunpack.c.h.b16 %v418
  %v466 = vunpack.c.l.b16 %v419
  %v467 = vunpack.c.h.b16 %v419
  %v468 = vunpack.c.l.b16 %v420
  %v469 = vunpack.c.h.b16 %v420
  %v470 = vunpack.c.l.b16 %v421
  %v471 = vunpack.c.h.b16 %v421
  %v472 = vunpack.c.l.b16 %v422
  %v473 = vunpack.c.h.b16 %v422
  %v474 = vunpack.c.l.b16 %v423
  %v475 = vunpack.c.h.b16 %v423
  %v476 = vunpack.c.l.b16 %v424
  %v477 = vunpack.c.h.b16 %v424
  %v478 = vunpack.c.l.b16 %v425
  %v479 = vunpack.c.h.b16 %v425
  %v480 = vunpack.c.l.b16 %v426
  %v481 = vunpack.c.h.b16 %v426
  %v482 = vunpack.c.l.b16 %v427
  %v483 = vunpack.c.h.b16 %v427
  %v484 = vpack.c.b16 %v468, %v464
  %v485 = vpack.c.b16 %v469, %v465
  %v486 = vpack.c.b16 %v470, %v466
  %v487 = vpack.c.b16 %v471, %v467
  %v488 = vpack.c.b16 %v476, %v472
  %v489 = vpack.c.b16 %v477, %v473
  %v490 = vpack.c.b16 %v478, %v474
  %v491 = vpack.c.b16 %v479, %v475
  %v492 = vpack.c.b16 %v480, %v480
  %v493 = vpack.c.b16 %v481, %v481
  %v494 = vpack.c.b16 %v482, %v482
  %v495 = vpack.c.b16 %v483, %v483
  %vm504 = vcmask 293888
  %v506 = vsel %vm504, %v452, 0
  %v509 = vsel %vm504, %v453, 0
  %vm511 = vcmask 1041408
  %v513 = vsel %vm511, %v492, 0
  %v516 = vsel %vm511, %v493, 0
  %v519 = vsel %vm511, %v494, 0
  %v522 = vsel %vm511, %v495, 0
  %524 = vmatprep.subr.bf16.mxu0 %v485
  %525 = vmatpush1.bf16.msra.mxu0 %v484
  %526 = vmatprep.subr.bf16.mxu0 %v489
  %527 = vmatpush1.bf16.msra.mxu0 %v488
  %528 = vmatprep.subr.bf16.mxu0 %v516
  %529 = vmatpush1.bf16.msra.mxu0 %v513
  %530 = vmatprep.subr.bf16.mxu0 0
  %531 = vmatpush1.bf16.msra.mxu0 0
  %532 = vmatprep.subr.bf16.mxu0 0
  %533 = vmatpush1.bf16.msra.mxu0 0
  %534 = vmatprep.subr.bf16.mxu0 0
  %535 = vmatpush1.bf16.msra.mxu0 0
  %536 = vmatprep.subr.bf16.mxu0 0
  %537 = vmatpush1.bf16.msra.mxu0 0
  %538 = vmatprep.subr.bf16.mxu0 0
  %539 = vmatpush1.bf16.msra.mxu0 0
  %540 = vmatprep.subr.bf16.mxu0 0
  %541 = vmatpush1.bf16.msra.mxu0 0
  %542 = vmatprep.subr.bf16.mxu0 0
  %543 = vmatpush1.bf16.msra.mxu0 0
  %544 = vmatprep.subr.bf16.mxu0 0
  %545 = vmatpush1.bf16.msra.mxu0 0
  %546 = vmatprep.subr.bf16.mxu0 0
  %547 = vmatpush1.bf16.msra.mxu0 0
  %548 = vmatprep.subr.bf16.mxu0 0
  %549 = vmatpush1.bf16.msra.mxu0 0
  %550 = vmatprep.subr.bf16.mxu0 0
  %551 = vmatpush1.bf16.msra.mxu0 0
  %552 = vmatprep.subr.bf16.mxu0 0
  %553 = vmatpush1.bf16.msra.mxu0 0
  %554 = vmatprep.subr.bf16.mxu0 0
  %555 = vmatpush1.bf16.msra.mxu0 0
  %556 = vmatprep.mubr.bf16.mxu0 0
  %557 = vmatmul.mubr.bf16.gmra.mrb[0].mxu0 %v506
  %v558 = vpop.f32.mrb[0].mxu0
  %v559 = vadd.f32 %v430, %v558
  %v560 = vpop.f32.mrb[0].mxu0
  %v561 = vadd.f32 %v430, %v560
  %v562 = vpop.f32.mrb[0].mxu0
  %v563 = vadd.f32 %v434, %v562
  %v564 = vpop.f32.mrb[0].mxu0
  %v565 = vadd.f32 %v434, %v564
  %566 = vmatprep.mubr.bf16.mxu0 0
  %567 = vmatmul.mubr.bf16.gmra.mrb[0].mxu0 %v509
  %v568 = vpop.f32.mrb[0].mxu0
  %v569 = vadd.f32 %v438, %v568
  %v570 = vpop.f32.mrb[0].mxu0
  %v571 = vadd.f32 %v438, %v570
  %v572 = vpop.f32.mrb[0].mxu0
  %v573 = vadd.f32 %v442, %v572
  %v574 = vpop.f32.mrb[0].mxu0
  %v575 = vadd.f32 %v442, %v574
  %576 = vdwg.mxu0
  %577 = vmatprep.subr.bf16.mxu0 %v487
  %578 = vmatpush1.bf16.msra.mxu0 %v486
  %579 = vmatprep.subr.bf16.mxu0 %v491
  %580 = vmatpush1.bf16.msra.mxu0 %v490
  %581 = vmatprep.subr.bf16.mxu0 %v522
  %582 = vmatpush1.bf16.msra.mxu0 %v519
  %583 = vmatprep.subr.bf16.mxu0 0
  %584 = vmatpush1.bf16.msra.mxu0 0
  %585 = vmatprep.subr.bf16.mxu0 0
  %586 = vmatpush1.bf16.msra.mxu0 0
  %587 = vmatprep.subr.bf16.mxu0 0
  %588 = vmatpush1.bf16.msra.mxu0 0
  %589 = vmatprep.subr.bf16.mxu0 0
  %590 = vmatpush1.bf16.msra.mxu0 0
  %591 = vmatprep.subr.bf16.mxu0 0
  %592 = vmatpush1.bf16.msra.mxu0 0
  %593 = vmatprep.subr.bf16.mxu0 0
  %594 = vmatpush1.bf16.msra.mxu0 0
  %595 = vmatprep.subr.bf16.mxu0 0
  %596 = vmatpush1.bf16.msra.mxu0 0
  %597 = vmatprep.subr.bf16.mxu0 0
  %598 = vmatpush1.bf16.msra.mxu0 0
  %599 = vmatprep.subr.bf16.mxu0 0
  %600 = vmatpush1.bf16.msra.mxu0 0
  %601 = vmatprep.subr.bf16.mxu0 0
  %602 = vmatpush1.bf16.msra.mxu0 0
  %603 = vmatprep.subr.bf16.mxu0 0
  %604 = vmatpush1.bf16.msra.mxu0 0
  %605 = vmatprep.subr.bf16.mxu0 0
  %606 = vmatpush1.bf16.msra.mxu0 0
  %607 = vmatprep.subr.bf16.mxu0 0
  %608 = vmatpush1.bf16.msra.mxu0 0
  %609 = vmatprep.mubr.bf16.mxu0 0
  %610 = vmatmul.mubr.bf16.gmra.mrb[0].mxu0 %v506
  %v611 = vpop.f32.mrb[0].mxu0
  %v612 = vadd.f32 %v430, %v611
  %v613 = vpop.f32.mrb[0].mxu0
  %v614 = vadd.f32 %v430, %v613
  %v615 = vpop.f32.mrb[0].mxu0
  %v616 = vadd.f32 %v434, %v615
  %v617 = vpop.f32.mrb[0].mxu0
  %v618 = vadd.f32 %v434, %v617
  %619 = vmatprep.mubr.bf16.mxu0 0
  %620 = vmatmul.mubr.bf16.gmra.mrb[0].mxu0 %v509
  %v621 = vpop.f32.mrb[0].mxu0
  %v622 = vadd.f32 %v438, %v621
  %v623 = vpop.f32.mrb[0].mxu0
  %v624 = vadd.f32 %v438, %v623
  %v625 = vpop.f32.mrb[0].mxu0
  %v626 = vadd.f32 %v442, %v625
  %v627 = vpop.f32.mrb[0].mxu0
  %v628 = vadd.f32 %v442, %v627
  %629 = vdwg.mxu0
  %v630 = vmax.f32 %v559, 0.0
  %v631 = vmax.f32 %v561, 0.0
  %v632 = vmax.f32 %v612, 0.0
  %v633 = vmax.f32 %v614, 0.0
  %v634 = vmax.f32 %v563, 0.0
  %v635 = vmax.f32 %v565, 0.0
  %v636 = vmax.f32 %v616, 0.0
  %v637 = vmax.f32 %v618, 0.0
  %v638 = vmax.f32 %v569, 0.0
  %v639 = vmax.f32 %v571, 0.0
  %v640 = vmax.f32 %v622, 0.0
  %v641 = vmax.f32 %v624, 0.0
  %v642 = vmax.f32 %v573, 0.0
  %v643 = vmax.f32 %v575, 0.0
  %v644 = vmax.f32 %v626, 0.0
  %v645 = vmax.f32 %v628, 0.0
  %647 = vset.pattern.permute.xlu0 0
  %648 = vperm.xlu0 %647, %v407
  %v649 = vpop.permute.xlu0 %648
  %652 = vset.pattern.permute.xlu0 0
  %653 = vperm.xlu0 %652, %v409
  %v654 = vpop.permute.xlu0 %653
  %657 = vset.pattern.permute.xlu0 0
  %658 = vperm.xlu0 %657, %v411
  %v659 = vpop.permute.xlu0 %658
  %662 = vset.pattern.permute.xlu0 0
  %663 = vperm.xlu0 %662, %v413
  %v664 = vpop.permute.xlu0 %663
  %v666 = vmul.f32 %v630, %v649
  %v667 = vmul.f32 %v631, %v649
  %v668 = vmul.f32 %v634, %v654
  %v669 = vmul.f32 %v635, %v654
  %v670 = vmul.f32 %v638, %v659
  %v671 = vmul.f32 %v639, %v659
  %v672 = vmul.f32 %v642, %v664
  %v673 = vmul.f32 %v643, %v664
  %v674 = vpack.c.bf16 %v668, %v666
  %v675 = vpack.c.bf16 %v669, %v667
  %v676 = vpack.c.bf16 %v672, %v670
  %v677 = vpack.c.bf16 %v673, %v671
  %678 = vset.pattern.permute.xlu0 1
  %679 = vperm.xlu0 %678, %v407
  %v680 = vpop.permute.xlu0 %679
  %682 = vset.pattern.permute.xlu0 1
  %683 = vperm.xlu0 %682, %v409
  %v684 = vpop.permute.xlu0 %683
  %686 = vset.pattern.permute.xlu0 1
  %687 = vperm.xlu0 %686, %v411
  %v688 = vpop.permute.xlu0 %687
  %690 = vset.pattern.permute.xlu0 1
  %691 = vperm.xlu0 %690, %v413
  %v692 = vpop.permute.xlu0 %691
  %v694 = vmul.f32 %v632, %v680
  %v695 = vmul.f32 %v633, %v680
  %v696 = vmul.f32 %v636, %v684
  %v697 = vmul.f32 %v637, %v684
  %v698 = vmul.f32 %v640, %v688
  %v699 = vmul.f32 %v641, %v688
  %v700 = vmul.f32 %v644, %v692
  %v701 = vmul.f32 %v645, %v692
  %v702 = vpack.c.bf16 %v696, %v694
  %v703 = vpack.c.bf16 %v697, %v695
  %v704 = vpack.c.bf16 %v700, %v698
  %v705 = vpack.c.bf16 %v701, %v699
  %v706 = vld [vmem:[%s3] sm:$0xf]
  %v707 = vld [vmem:[%s3 + $0x4] sm:$0xf]
  %708 = vset.pattern.permute.xlu0 95
  %709 = vperm.xlu0 %708, %v21
  %v710 = vpop.permute.xlu0 %709
  %712 = vset.pattern.permute.xlu0 95
  %713 = vperm.xlu0 %712, %v22
  %v714 = vpop.permute.xlu0 %713
  %v718 = vunpack.c.l.b16 %v706
  %v719 = vunpack.c.l.b16 %v707
  %v720 = vpack.c.b16 %v719, %v718
  %v722 = vsel %vm175, %v720, 0
  %724 = vmatprep.subr.bf16.mxu0 %v675
  %725 = vmatpush1.bf16.msra.mxu0 %v674
  %726 = vmatprep.subr.bf16.mxu0 %v677
  %727 = vmatpush1.bf16.msra.mxu0 %v676
  %728 = vmatprep.subr.bf16.mxu0 0
  %729 = vmatpush1.bf16.msra.mxu0 0
  %730 = vmatprep.subr.bf16.mxu0 0
  %731 = vmatpush1.bf16.msra.mxu0 0
  %732 = vmatprep.subr.bf16.mxu0 0
  %733 = vmatpush1.bf16.msra.mxu0 0
  %734 = vmatprep.subr.bf16.mxu0 0
  %735 = vmatpush1.bf16.msra.mxu0 0
  %736 = vmatprep.subr.bf16.mxu0 0
  %737 = vmatpush1.bf16.msra.mxu0 0
  %738 = vmatprep.subr.bf16.mxu0 0
  %739 = vmatpush1.bf16.msra.mxu0 0
  %740 = vmatprep.subr.bf16.mxu0 0
  %741 = vmatpush1.bf16.msra.mxu0 0
  %742 = vmatprep.subr.bf16.mxu0 0
  %743 = vmatpush1.bf16.msra.mxu0 0
  %744 = vmatprep.subr.bf16.mxu0 0
  %745 = vmatpush1.bf16.msra.mxu0 0
  %746 = vmatprep.subr.bf16.mxu0 0
  %747 = vmatpush1.bf16.msra.mxu0 0
  %748 = vmatprep.subr.bf16.mxu0 0
  %749 = vmatpush1.bf16.msra.mxu0 0
  %750 = vmatprep.subr.bf16.mxu0 0
  %751 = vmatpush1.bf16.msra.mxu0 0
  %752 = vmatprep.subr.bf16.mxu0 0
  %753 = vmatpush1.bf16.msra.mxu0 0
  %754 = vmatprep.subr.bf16.mxu0 0
  %755 = vmatpush1.bf16.msra.mxu0 0
  %756 = vmatprep.mubr.bf16.mxu0 0
  %757 = vmatmul.mubr.bf16.gmra.mrb[0].mxu0 %v722
  %v758 = vpop.f32.mrb[0].mxu0
  %v759 = vadd.f32 %v710, %v758
  %v760 = vpop.f32.mrb[0].mxu0
  %v761 = vadd.f32 %v710, %v760
  %v762 = vpop.f32.mrb[0].mxu0
  %v763 = vadd.f32 %v714, %v762
  %v764 = vpop.f32.mrb[0].mxu0
  %v765 = vadd.f32 %v714, %v764
  %766 = vdwg.mxu0
  %767 = vmatprep.subr.bf16.mxu0 %v703
  %768 = vmatpush1.bf16.msra.mxu0 %v702
  %769 = vmatprep.subr.bf16.mxu0 %v705
  %770 = vmatpush1.bf16.msra.mxu0 %v704
  %771 = vmatprep.subr.bf16.mxu0 0
  %772 = vmatpush1.bf16.msra.mxu0 0
  %773 = vmatprep.subr.bf16.mxu0 0
  %774 = vmatpush1.bf16.msra.mxu0 0
  %775 = vmatprep.subr.bf16.mxu0 0
  %776 = vmatpush1.bf16.msra.mxu0 0
  %777 = vmatprep.subr.bf16.mxu0 0
  %778 = vmatpush1.bf16.msra.mxu0 0
  %779 = vmatprep.subr.bf16.mxu0 0
  %780 = vmatpush1.bf16.msra.mxu0 0
  %781 = vmatprep.subr.bf16.mxu0 0
  %782 = vmatpush1.bf16.msra.mxu0 0
  %783 = vmatprep.subr.bf16.mxu0 0
  %784 = vmatpush1.bf16.msra.mxu0 0
  %785 = vmatprep.subr.bf16.mxu0 0
  %786 = vmatpush1.bf16.msra.mxu0 0
  %787 = vmatprep.subr.bf16.mxu0 0
  %788 = vmatpush1.bf16.msra.mxu0 0
  %789 = vmatprep.subr.bf16.mxu0 0
  %790 = vmatpush1.bf16.msra.mxu0 0
  %791 = vmatprep.subr.bf16.mxu0 0
  %792 = vmatpush1.bf16.msra.mxu0 0
  %793 = vmatprep.subr.bf16.mxu0 0
  %794 = vmatpush1.bf16.msra.mxu0 0
  %795 = vmatprep.subr.bf16.mxu0 0
  %796 = vmatpush1.bf16.msra.mxu0 0
  %797 = vmatprep.subr.bf16.mxu0 0
  %798 = vmatpush1.bf16.msra.mxu0 0
  %799 = vmatprep.mubr.bf16.mxu0 0
  %800 = vmatmul.mubr.bf16.gmra.mrb[0].mxu0 %v722
  %v801 = vpop.f32.mrb[0].mxu0
  %v802 = vadd.f32 %v710, %v801
  %v803 = vpop.f32.mrb[0].mxu0
  %v804 = vadd.f32 %v710, %v803
  %v805 = vpop.f32.mrb[0].mxu0
  %v806 = vadd.f32 %v714, %v805
  %v807 = vpop.f32.mrb[0].mxu0
  %v808 = vadd.f32 %v714, %v807
  %809 = vdwg.mxu0
  %810 = vst [vmem:[%s5] sm:$0xff] %v759
  %811 = vst [vmem:[%s5 + $0x8] sm:$0xff] %v761
  %812 = vst [vmem:[%s5 + $0x10] sm:$0xff] %v763
  %813 = vst [vmem:[%s5 + $0x18] sm:$0xff] %v765
  %s814 = scalar_lea.vmem %s5, 32
  %815 = vst [vmem:[%s814] sm:$0xff] %v802
  %816 = vst [vmem:[%s814 + $0x8] sm:$0xff] %v804
  %817 = vst [vmem:[%s814 + $0x10] sm:$0xff] %v806
  %818 = vst [vmem:[%s814 + $0x18] sm:$0xff] %v808
  // Predicated region
  $region22: #{context_net_forward.1} parent=0 // pred_check
    _
  $region23: #{context_net_forward.1} parent=0 // pred_check_branch
    %820 = sbr.rel (0) target = $region25
  $region24: #{context_net_forward.1} parent=0 // pred_region
    _
  $region25: #{context_net_forward.1} parent=0 // pred_fallthru
    _
  // Predicated region
  $region26: #{context_net_forward.1} parent=0 // pred_check
    _
  $region27: #{context_net_forward.1} parent=0 // pred_check_branch
    %822 = sbr.rel (0) target = $region29
  $region28: #{context_net_forward.1} parent=0 // pred_region
    _
  $region29: #{context_net_forward.1} parent=0 // pred_fallthru
    _

</llo_original>
